<compile_context>
chip_gen: v7x
topology: tpu7x:2x2x1
jax: 0.10.0
libtpu: 0.0.40
codegen_flags: <defaults>
</compile_context>

<pallas_src>
import functools

import jax
import jax.numpy as jnp
from jax import lax
from jax.experimental import pallas as pl
from jax.experimental.pallas import tpu as pltpu


# ---------------------------------------------------------------------------
# Kernel
# ---------------------------------------------------------------------------
def _nt_adv_kernel(ori_ref, adv_ref, fp_ref, out_ref, *,
                   temperature, beta, tile_b, total_rows,
                   use_cosine, needs_mask, row_chunk):
    inv_t = jnp.float32(1.0 / temperature)
    beta_f = jnp.float32(beta)
    n_row_chunks = tile_b // row_chunk            # exact by wrapper construction
    block_row0 = pl.program_id(0) * tile_b

    def row_chunk_loss(r):
        """Sum of per-row loss over one (row_chunk, D) slice of the tile."""
        r0 = r * row_chunk
        if not isinstance(r0, int):
            r0 = pl.multiple_of(r0, row_chunk)

        # Loads + casts stay inside this chunk so only one row-chunk worth of
        # f32 temporaries is live at a time (no full-tile f32 materialization).
        o = ori_ref[pl.ds(r0, row_chunk), :].astype(jnp.float32)
        a = adv_ref[pl.ds(r0, row_chunk), :].astype(jnp.float32)
        f = fp_ref[pl.ds(r0, row_chunk), :].astype(jnp.float32)

        s_oa = jnp.sum(o * a, axis=-1, keepdims=True)   # (row_chunk, 1)
        s_fa = jnp.sum(f * a, axis=-1, keepdims=True)   # (row_chunk, 1)

        if use_cosine:
            eps2 = jnp.float32(1e-8 * 1e-8)
            n_o2 = jnp.sum(o * o, axis=-1, keepdims=True)
            n_a2 = jnp.sum(a * a, axis=-1, keepdims=True)   # shared by both pairs
            n_f2 = jnp.sum(f * f, axis=-1, keepdims=True)
            # max(||x||*||y||, eps) == sqrt(max(||x||^2*||y||^2, eps^2)); EUP rsqrt.
            s_oa = s_oa * lax.rsqrt(jnp.maximum(n_o2 * n_a2, eps2))
            s_fa = s_fa * lax.rsqrt(jnp.maximum(n_f2 * n_a2, eps2))

        per_row = (-jnp.exp(-s_oa * inv_t)
                   - beta_f * jnp.exp(-s_fa * inv_t))        # (row_chunk, 1)

        if needs_mask:
            row = (block_row0 + r0
                   + lax.broadcasted_iota(jnp.int32, per_row.shape, 0))
            # Zero padded rows of the last partial block (NaN/inf-safe).
            per_row = jnp.where(row < total_rows, per_row, 0.0)
        return jnp.sum(per_row)

    if n_row_chunks <= 1:
        partial = row_chunk_loss(0)
    else:
        partial = lax.fori_loop(0, n_row_chunks,
                                lambda r, acc: acc + row_chunk_loss(r),
                                jnp.float32(0.0))

    # Lane-dense per-tile partial; wrapper reads element [0, 0] of each block.
    out_ref[...] = jnp.full(out_ref.shape, partial, dtype=jnp.float32)


# ---------------------------------------------------------------------------
# Generation-aware configuration
# ---------------------------------------------------------------------------
@functools.lru_cache(maxsize=1)
def _hw_config():
    """Per-generation DMA/VMEM budgets. Conservative (v7x-safe) if unknown."""
    kind = ""
    try:
        kind = str(jax.devices()[0].device_kind).lower()
    except Exception:
        pass
    vmem_bytes = None
    try:
        vmem_bytes = int(pltpu.get_tpu_info().vmem_capacity_bytes)
    except Exception:
        vmem_bytes = None

    if vmem_bytes is not None:
        big_vmem = vmem_bytes >= (100 << 20)
    else:
        big_vmem = any(t in kind for t in ("v5", "v6"))
    is_v7x = ("v7" in kind) or ("7x" in kind) or (
        vmem_bytes is not None and not big_vmem)

    if big_vmem:
        # v5e / v6e: 128 MiB physical VMEM, single TensorCore per chip.
        return dict(input_budget=56 << 20, vmem_cap=96 << 20,
                    buffers=2, min_blocks=1)
    # v7x (64 MiB VMEM / TC, 2 TCs) or unknown: tight input buffering, keep
    # both cores fed with >= 4 grid blocks, try a 3-deep input pipeline.
    return dict(input_budget=26 << 20, vmem_cap=36 << 20,
                buffers=3 if is_v7x else 2, min_blocks=4)


def _choose_tile_b(B, D, itemsize, sublane_mult, input_budget, buffers):
    """Largest sublane-aligned row tile fitting the pipelined-input budget."""
    per_row_bytes = 3 * buffers * D * itemsize
    tile = input_budget // max(per_row_bytes, 1)
    tile = max(sublane_mult, (tile // sublane_mult) * sublane_mult)
    return B if tile >= B else tile


def _pick_row_chunk(tile_b, B, D, sublane_mult):
    """In-kernel row chunk bounding f32 temporaries to ~128K elems per array."""
    target = max(sublane_mult,
                 (131072 // max(D, 1)) // sublane_mult * sublane_mult)
    if tile_b <= target:
        return tile_b, tile_b
    if tile_b < B:
        tile_b = (tile_b // target) * target      # row chunks divide the tile
        return target, tile_b
    # Tile is the whole array; find a sublane-aligned divisor of it.
    c = target
    while c >= sublane_mult:
        if tile_b % c == 0:
            return c, tile_b
        c -= sublane_mult
    return tile_b, tile_b


def _input_spec(tile_b, D, buffers):
    index_map = lambda i: (i, 0)
    if buffers != 2:
        try:
            return pl.BlockSpec((tile_b, D), index_map,
                                pipeline_mode=pl.Buffered(buffers))
        except TypeError:
            pass
    return pl.BlockSpec((tile_b, D), index_map)


# ---------------------------------------------------------------------------
# Wrapper
# ---------------------------------------------------------------------------
def nt_adv_loss(ori, adv, fp, *, temperature, beta, batch_size,
                use_cosine_similarity=False, tile_b=None):
    """Pallas implementation of NTAdvLoss.forward. Returns a scalar f32."""
    B, D = ori.shape
    itemsize = jnp.dtype(ori.dtype).itemsize
    # Native sublane tile: 8 rows (f32), 16 (bf16/f16), 32 (int8/fp8).
    sublane_mult = max(8, 32 // max(itemsize, 1))

    cfg = _hw_config()
    buffers = cfg["buffers"]

    auto_tile = tile_b is None
    if auto_tile:
        tile_b = _choose_tile_b(B, D, itemsize, sublane_mult,
                                cfg["input_budget"], buffers)
    tile_b = min(int(tile_b), B)

    # Multi-TensorCore parts: keep >= min_blocks balanced grid blocks so the
    # "parallel" batch axis feeds every core's DMA engine.
    if auto_tile and cfg["min_blocks"] > 1 and B > cfg["min_blocks"] * sublane_mult:
        cap = -(-B // cfg["min_blocks"])                       # ceil(B / blocks)
        cap = -(-cap // sublane_mult) * sublane_mult           # round up to tile
        tile_b = min(tile_b, cap)

    if tile_b < B and tile_b % sublane_mult != 0:
        tile_b = max(sublane_mult, (tile_b // sublane_mult) * sublane_mult)

    row_chunk, tile_b = _pick_row_chunk(tile_b, B, D, sublane_mult)

    grid_b = pl.cdiv(B, tile_b)
    needs_mask = (B % tile_b) != 0

    kernel = functools.partial(
        _nt_adv_kernel,
        temperature=float(temperature), beta=float(beta),
        tile_b=tile_b, total_rows=B,
        use_cosine=bool(use_cosine_similarity), needs_mask=needs_mask,
        row_chunk=row_chunk)

    # VMEM: pipelined input blocks + per-step (1,8,128) output block +
    # in-kernel f32 row-chunk temporaries + headroom.
    in_block_bytes = 3 * buffers * tile_b * D * itemsize
    out_block_bytes = 2 * 1 * 8 * 128 * 4
    temp_bytes = 8 * row_chunk * D * 4
    vmem_needed = in_block_bytes + out_block_bytes + temp_bytes + (2 << 20)
    vmem_limit = int(min(max(vmem_needed, 16 << 20), cfg["vmem_cap"]))

    flops_per_row = (10 if use_cosine_similarity else 4) * D + 12
    cost = pl.CostEstimate(
        flops=flops_per_row * B,
        transcendentals=(4 if use_cosine_similarity else 2) * B,
        bytes_accessed=3 * B * D * itemsize + grid_b * 8 * 128 * 4)

    in_spec = _input_spec(tile_b, D, buffers)
    partials = pl.pallas_call(
        kernel,
        out_shape=jax.ShapeDtypeStruct((grid_b, 8, 128), jnp.float32),
        grid=(grid_b,),
        in_specs=[in_spec, in_spec, in_spec],
        out_specs=pl.BlockSpec((1, 8, 128), lambda i: (i, 0, 0)),
        compiler_params=pltpu.CompilerParams(
            dimension_semantics=("parallel",),
            vmem_limit_bytes=vmem_limit),
        cost_estimate=cost,
    )(ori, adv, fp)

    # De-duplication: original loss = 2 * sum(per_row) / (2 * batch_size).
    return jnp.sum(partials[:, 0, 0]) / jnp.float32(batch_size)


# ---------------------------------------------------------------------------
# Pure-JAX reference (mirrors the PyTorch module)
# ---------------------------------------------------------------------------
def _reference(ori, adv, fp, *, temperature, beta, batch_size,
               use_cosine_similarity=False):
    def sim(x, y):
        d = jnp.sum(x * y, axis=-1)
        if use_cosine_similarity:
            nx = jnp.linalg.norm(x, axis=-1)
            ny = jnp.linalg.norm(y, axis=-1)
            return d / jnp.maximum(nx * ny, 1e-8)
        return d

    loss1 = jnp.concatenate([sim(ori, adv), sim(adv, ori)]) / temperature
    loss2 = jnp.concatenate([sim(fp, adv), sim(adv, fp)]) / temperature
    loss = -jnp.exp(-loss1) - beta * jnp.exp(-loss2)
    return jnp.sum(loss) / (2 * batch_size)


if __name__ == "__main__":
    ok = True

    def check(ori, adv, fp, *, T, beta, use_cos, tb):
        out = nt_adv_loss(ori, adv, fp, temperature=T, beta=beta,
                          batch_size=ori.shape[0],
                          use_cosine_similarity=use_cos, tile_b=tb)
        out = jax.block_until_ready(out)
        ref = _reference(ori.astype(jnp.float32), adv.astype(jnp.float32),
                         fp.astype(jnp.float32), temperature=T, beta=beta,
                         batch_size=ori.shape[0],
                         use_cosine_similarity=use_cos)
        return bool(jnp.allclose(out, ref, rtol=1e-5, atol=1e-5))

    # Case 1: tiny f32 batch, B not a multiple of 8; auto single block and an
    # explicit tiled path with a masked tail; dot and cosine similarity.
    B, D = 12, 128
    k1, k2, k3 = jax.random.split(jax.random.PRNGKey(0), 3)
    ori = jax.random.normal(k1, (B, D), dtype=jnp.float32)
    adv = jax.random.normal(k2, (B, D), dtype=jnp.float32)
    fp = jax.random.normal(k3, (B, D), dtype=jnp.float32)
    for use_cos in (False, True):
        for tb in (None, 8):
            ok &= check(ori, adv, fp, T=0.5, beta=1.0, use_cos=use_cos, tb=tb)

    # Case 2: bf16 inputs -> dtype-aware 16-row sublane tiles + masked tail.
    B, D = 40, 256
    k1, k2, k3 = jax.random.split(jax.random.PRNGKey(1), 3)
    ori = jax.random.normal(k1, (B, D), dtype=jnp.float32).astype(jnp.bfloat16)
    adv = jax.random.normal(k2, (B, D), dtype=jnp.float32).astype(jnp.bfloat16)
    fp = jax.random.normal(k3, (B, D), dtype=jnp.float32).astype(jnp.bfloat16)
    ok &= check(ori, adv, fp, T=0.5, beta=0.7, use_cos=False, tb=16)
    ok &= check(ori, adv, fp, T=0.5, beta=0.7, use_cos=True, tb=16)

    # Case 3: larger D, auto tile (exercises the multi-core block clamp path).
    B, D = 64, 1536
    k1, k2, k3 = jax.random.split(jax.random.PRNGKey(2), 3)
    ori = jax.random.normal(k1, (B, D), dtype=jnp.float32)
    adv = jax.random.normal(k2, (B, D), dtype=jnp.float32)
    fp = jax.random.normal(k3, (B, D), dtype=jnp.float32)
    ok &= check(ori, adv, fp, T=0.2, beta=1.3, use_cos=True, tb=None)

    # Case 4: explicit large tile with B not divisible by it -> exercises the
    # in-kernel row-chunk loop together with tail-row masking.
    B, D = 400, 1024
    k1, k2, k3 = jax.random.split(jax.random.PRNGKey(3), 3)
    ori = jax.random.normal(k1, (B, D), dtype=jnp.float32)
    adv = jax.random.normal(k2, (B, D), dtype=jnp.float32)
    fp = jax.random.normal(k3, (B, D), dtype=jnp.float32)
    ok &= check(ori, adv, fp, T=50.0, beta=0.5, use_cos=False, tb=320)

    print("KERNEL_OK" if ok else "MISMATCH")
</pallas_src>

<mosaic_0001>
module attributes {stable_mosaic.version = 11 : i64} {
  func.func @_nt_adv_kernel(%arg0: i32, %arg1: memref<12x128xf32, #tpu.memory_space<vmem>>, %arg2: memref<12x128xf32, #tpu.memory_space<vmem>>, %arg3: memref<12x128xf32, #tpu.memory_space<vmem>>, %arg4: memref<1x8x128xf32, #tpu.memory_space<vmem>>) attributes {dimension_semantics = [#tpu.dimension_semantics<parallel>], iteration_bounds = array<i64: 1>, scalar_prefetch = 0 : i64, scratch_operands = 0 : i64, tpu.core_type = #tpu.core_type<tc>, window_params = [{transform_indices = @transform_0, window_bounds = array<i64: 12, 128>}, {transform_indices = @transform_1, window_bounds = array<i64: 12, 128>}, {transform_indices = @transform_2, window_bounds = array<i64: 12, 128>}, {transform_indices = @transform_3, window_bounds = array<i64: 1, 8, 128>}]} {
    %c0 = arith.constant 0 : index
    %c0_0 = arith.constant 0 : index
    %0 = vector.load %arg1[%c0, %c0_0] : memref<12x128xf32, #tpu.memory_space<vmem>>, vector<12x128xf32>
    %c0_1 = arith.constant 0 : index
    %c0_2 = arith.constant 0 : index
    %1 = vector.load %arg2[%c0_1, %c0_2] : memref<12x128xf32, #tpu.memory_space<vmem>>, vector<12x128xf32>
    %c0_3 = arith.constant 0 : index
    %c0_4 = arith.constant 0 : index
    %2 = vector.load %arg3[%c0_3, %c0_4] : memref<12x128xf32, #tpu.memory_space<vmem>>, vector<12x128xf32>
    %3 = arith.mulf %0, %1 : vector<12x128xf32>
    %cst = arith.constant dense<0.000000e+00> : vector<12xf32>
    %4 = vector.multi_reduction <add>, %3, %cst [1] : vector<12x128xf32> to vector<12xf32>
    %5 = vector.shape_cast %4 : vector<12xf32> to vector<12x1xf32>
    %6 = arith.mulf %2, %1 : vector<12x128xf32>
    %cst_5 = arith.constant dense<0.000000e+00> : vector<12xf32>
    %7 = vector.multi_reduction <add>, %6, %cst_5 [1] : vector<12x128xf32> to vector<12xf32>
    %8 = vector.shape_cast %7 : vector<12xf32> to vector<12x1xf32>
    %cst_6 = arith.constant 0.000000e+00 : f32
    %9 = vector.broadcast %cst_6 : f32 to vector<12x1xf32>
    %10 = arith.subf %9, %5 : vector<12x1xf32>
    %cst_7 = arith.constant 2.000000e+00 : f32
    %11 = vector.broadcast %cst_7 : f32 to vector<12x1xf32>
    %12 = arith.mulf %10, %11 : vector<12x1xf32>
    %13 = math.exp %12 : vector<12x1xf32>
    %cst_8 = arith.constant 0.000000e+00 : f32
    %14 = vector.broadcast %cst_8 : f32 to vector<12x1xf32>
    %15 = arith.subf %14, %13 : vector<12x1xf32>
    %cst_9 = arith.constant 0.000000e+00 : f32
    %16 = vector.broadcast %cst_9 : f32 to vector<12x1xf32>
    %17 = arith.subf %16, %8 : vector<12x1xf32>
    %cst_10 = arith.constant 2.000000e+00 : f32
    %18 = vector.broadcast %cst_10 : f32 to vector<12x1xf32>
    %19 = arith.mulf %17, %18 : vector<12x1xf32>
    %20 = math.exp %19 : vector<12x1xf32>
    %cst_11 = arith.constant 1.000000e+00 : f32
    %21 = vector.broadcast %cst_11 : f32 to vector<12x1xf32>
    %22 = arith.mulf %21, %20 : vector<12x1xf32>
    %23 = arith.subf %15, %22 : vector<12x1xf32>
    %24 = vector.shape_cast %23 : vector<12x1xf32> to vector<1x12x1xf32>
    %cst_12 = arith.constant dense<0.000000e+00> : vector<1xf32>
    %25 = vector.multi_reduction <add>, %24, %cst_12 [1, 2] : vector<1x12x1xf32> to vector<1xf32>
    %26 = vector.shape_cast %25 : vector<1xf32> to vector<1x1x1xf32>
    %27 = vector.extract %26[0, 0, 0] : f32 from vector<1x1x1xf32>
    %28 = vector.broadcast %27 : f32 to vector<1x8x128xf32>
    %c0_13 = arith.constant 0 : index
    %c0_14 = arith.constant 0 : index
    %c0_15 = arith.constant 0 : index
    %29 = vector.load %arg4[%c0_13, %c0_14, %c0_15] : memref<1x8x128xf32, #tpu.memory_space<vmem>>, vector<1x8x128xf32>
    tpu.vector_store %arg4[%c0_13, %c0_14, %c0_15], %28 {strides = array<i32>} : memref<1x8x128xf32, #tpu.memory_space<vmem>>, vector<1x8x128xf32>,
    return
  }
  func.func @transform_0(%arg0: i32) -> (i32, i32) {
    %c0_i32 = arith.constant 0 : i32
    %c0_i32_0 = arith.constant 0 : i32
    return %arg0, %c0_i32 : i32, i32
  }
  func.func @transform_1(%arg0: i32) -> (i32, i32) {
    %c0_i32 = arith.constant 0 : i32
    %c0_i32_0 = arith.constant 0 : i32
    return %arg0, %c0_i32 : i32, i32
  }
  func.func @transform_2(%arg0: i32) -> (i32, i32) {
    %c0_i32 = arith.constant 0 : i32
    %c0_i32_0 = arith.constant 0 : i32
    return %arg0, %c0_i32 : i32, i32
  }
  func.func @transform_3(%arg0: i32) -> (i32, i32, i32) {
    %c0_i32 = arith.constant 0 : i32
    %c0_i32_0 = arith.constant 0 : i32
    %c0_i32_1 = arith.constant 0 : i32
    return %arg0, %c0_i32, %c0_i32_0 : i32, i32, i32
  }
}

</mosaic_0001>

<llo_original>
// kernel: tpu_custom_call.1
$region0: #{tpu_custom_call.1}
  #allocation0 [shape = 'u32[]', space=smem, size = 0x4, offset = 0x4, fixed_abs, tag = 'smem constant byte address 0x4 - core index']
  #allocation1 [shape = 'u32[144,128]{1,0:T(1,128)}', space=vmem, size = 0x12000, scoped, tag = 'internal scratch']
  %s0 = inlined_call_operand.hbm [shape: f32[12,128], index: 0, kind: input, shape index: {}]
  %s1 = inlined_call_operand.hbm [shape: f32[12,128], index: 1, kind: input, shape index: {}]
  %s2 = inlined_call_operand.hbm [shape: f32[12,128], index: 2, kind: input, shape index: {}]
  %s3 = inlined_call_operand.hbm [shape: f32[1,8,128], index: 3, kind: output, shape index: {}]
  %s4 = sld [smem:[#allocation0]]
  $region34: #{tpu_custom_call.1} parent=0
    _
  %s6 = ssub.s32 1, %s4
  %s7 = scalar_select 0, %s6, %s4
  $region1: #{tpu_custom_call.1} parent=0
    #allocation2 [shape = 'u8[8192]{0}', space=vmem, size = 0x2000, scoped, tag = 'input window, operand 0, single buffered']
    #allocation3 [shape = 's32[1]{0}', space=sflag, size = 0x4, scoped, tag = 'scoped memory for tpu_custom_call.1']
    #allocation4 [shape = 's32[1]{0}', space=sflag, size = 0x4, scoped, tag = 'scoped memory for tpu_custom_call.1']
    #allocation5 [shape = 'u8[8192]{0}', space=vmem, size = 0x2000, scoped, tag = 'input window, operand 1, single buffered']
    #allocation6 [shape = 's32[1]{0}', space=sflag, size = 0x4, scoped, tag = 'scoped memory for tpu_custom_call.1']
    #allocation7 [shape = 'u8[8192]{0}', space=vmem, size = 0x2000, scoped, tag = 'input window, operand 2, single buffered']
    #allocation8 [shape = 'u8[4096]{0}', space=vmem, size = 0x1000, scoped, tag = 'output window, operand 0, single buffered']
    %8 = vsyncpa [#allocation3], 0
    %9 = vsyncpa [#allocation6], 0
    %10 = vsyncpa [#allocation4], 0
    // Predicated region
    $region2: #{tpu_custom_call.1} parent=1 // pred_check
      _
    $region3: #{tpu_custom_call.1} parent=1 // pred_check_branch
      %12 = sbr.rel (0) target = $region5
    $region4: #{tpu_custom_call.1} parent=1 // pred_region
      %s14 = ssub.s32 256, 256
      %15 = vsyncadd [#allocation3], %s14
      %s16 = sshll.u32 [#allocation2], 4
      %s17 = int_to_ptr.vmem [resolvable:$true] %s16
      %22 = dma.hbm_to_vmem [thread:$0]  %s0, 256, %s17, [#allocation3], 128, 128, 8
    $region5: #{tpu_custom_call.1} parent=1 // pred_fallthru
      _
    // Predicated region
    $region6: #{tpu_custom_call.1} parent=1 // pred_check
      _
    $region7: #{tpu_custom_call.1} parent=1 // pred_check_branch
      %24 = sbr.rel (0) target = $region9
    $region8: #{tpu_custom_call.1} parent=1 // pred_region
      %s26 = ssub.s32 256, 256
      %27 = vsyncadd [#allocation6], %s26
      %s28 = sshll.u32 [#allocation5], 4
      %s29 = int_to_ptr.vmem [resolvable:$true] %s28
      %34 = dma.hbm_to_vmem [thread:$0]  %s1, 256, %s29, [#allocation6], 128, 128, 8
    $region9: #{tpu_custom_call.1} parent=1 // pred_fallthru
      _
    // Predicated region
    $region10: #{tpu_custom_call.1} parent=1 // pred_check
      _
    $region11: #{tpu_custom_call.1} parent=1 // pred_check_branch
      %36 = sbr.rel (0) target = $region13
    $region12: #{tpu_custom_call.1} parent=1 // pred_region
      %s38 = ssub.s32 256, 256
      %39 = vsyncadd [#allocation6], %s38
      %s40 = sshll.u32 [#allocation7], 4
      %s41 = int_to_ptr.vmem [resolvable:$true] %s40
      %46 = dma.hbm_to_vmem [thread:$0]  %s2, 256, %s41, [#allocation6], 128, 128, 8
    $region13: #{tpu_custom_call.1} parent=1 // pred_fallthru
      _
    // Predicated region
    $region14: #{tpu_custom_call.1} parent=1 // pred_check
      _
    $region15: #{tpu_custom_call.1} parent=1 // pred_check_branch
      %48 = sbr.rel (0) target = $region17
    $region16: #{tpu_custom_call.1} parent=1 // pred_region
      %49 = dma.done [#allocation3], 256
    $region17: #{tpu_custom_call.1} parent=1 // pred_fallthru
      _
    // Predicated region
    $region18: #{tpu_custom_call.1} parent=1 // pred_check
      _
    $region19: #{tpu_custom_call.1} parent=1 // pred_check_branch
      %51 = sbr.rel (0) target = $region21
    $region20: #{tpu_custom_call.1} parent=1 // pred_region
      %52 = dma.done [#allocation6], 256
    $region21: #{tpu_custom_call.1} parent=1 // pred_fallthru
      _
    // Predicated region
    $region22: #{tpu_custom_call.1} parent=1 // pred_check
      _
    $region23: #{tpu_custom_call.1} parent=1 // pred_check_branch
      %54 = sbr.rel (0) target = $region25
    $region24: #{tpu_custom_call.1} parent=1 // pred_region
      %55 = dma.done [#allocation6], 256
    $region25: #{tpu_custom_call.1} parent=1 // pred_fallthru
      _
    %v56 = vld [vmem:[#allocation2] sm:$0xff]
    %v57 = vld [vmem:[#allocation2 + $0x8] sm:$0xf]
    %v58 = vld [vmem:[#allocation5] sm:$0xff]
    %v59 = vld [vmem:[#allocation5 + $0x8] sm:$0xf]
    %v60 = vld [vmem:[#allocation7] sm:$0xff]
    %v61 = vld [vmem:[#allocation7 + $0x8] sm:$0xf]
    %v62 = vmul.f32 %v56, %v58
    %v63 = vmul.f32 %v57, %v59
    %64 = vadd.xlane.f32.xlu0 %v62
    %v65 = vpop.xlane.xlu0 %64
    %vm66 = vcmask 1043456
    %v67 = vsel %vm66, %v63, 0.0
    %68 = vadd.xlane.f32.xlu0 %v67
    %v69 = vpop.xlane.xlu0 %68
    %v70 = vmul.f32 %v60, %v58
    %v71 = vmul.f32 %v61, %v59
    %72 = vadd.xlane.f32.xlu0 %v70
    %v73 = vpop.xlane.xlu0 %72
    %v74 = vsel %vm66, %v71, 0.0
    %75 = vadd.xlane.f32.xlu0 %v74
    %v76 = vpop.xlane.xlu0 %75
    %v77 = vsub.f32 0.0, %v65
    %v78 = vsub.f32 0.0, %v69
    %v79 = vmul.f32 %v77, 2.0
    %v80 = vmul.f32 %v78, 2.0
    %v81 = vmul.f32 %v79, 1.442695
    %v82 = vpow.pop %v81
    %v83 = vmul.f32 %v80, 1.442695
    %v84 = vpow.pop %v83
    %v85 = vsub.f32 0.0, %v82
    %v86 = vsub.f32 0.0, %v84
    %v87 = vsub.f32 0.0, %v73
    %v88 = vsub.f32 0.0, %v76
    %v89 = vmul.f32 %v87, 2.0
    %v90 = vmul.f32 %v88, 2.0
    %v91 = vmul.f32 %v89, 1.442695
    %v92 = vpow.pop %v91
    %v93 = vmul.f32 %v90, 1.442695
    %v94 = vpow.pop %v93
    %v95 = vsub.f32 %v85, %v92
    %v96 = vsub.f32 %v86, %v94
    %vm97 = vcmask 7168
    %v98 = vsel %vm97, %v95, 0.0
    %vm99 = vcmask 3072
    %v100 = vsel %vm99, %v96, 0.0
    %v101 = vadd.f32 %v98, %v100
    %102 = vadd.xlane.f32.xlu0 %v101
    %v103 = vpop.xlane.xlu0 %102
    %v104 = vrot.slane %v103, 4
    %v105 = vadd.f32 %v103, %v104
    %v106 = vrot.slane %v105, 2
    %v107 = vadd.f32 %v105, %v106
    %v108 = vrot.slane %v107, 1
    %v109 = vadd.f32 %v107, %v108
    %s110 = vtos %v109
    %v111 = vstv %s110
    %112 = vst [vmem:[#allocation8] sm:$0xff] %v111
    // Predicated region
    $region26: #{tpu_custom_call.1} parent=1 // pred_check
      _
    $region27: #{tpu_custom_call.1} parent=1 // pred_check_branch
      %114 = sbr.rel (0) target = $region29
    $region28: #{tpu_custom_call.1} parent=1 // pred_region
      %s116 = ssub.s32 128, 128
      %117 = vsyncadd [#allocation4], %s116
      %s119 = sshll.u32 [#allocation8], 4
      %s120 = int_to_ptr.vmem [resolvable:$true] %s119
      %122 = dma.vmem_to_hbm [thread:$0]  %s120, 128, %s3, [#allocation4]
    $region29: #{tpu_custom_call.1} parent=1 // pred_fallthru
      _
    // Predicated region
    $region30: #{tpu_custom_call.1} parent=1 // pred_check
      _
    $region31: #{tpu_custom_call.1} parent=1 // pred_check_branch
      %124 = sbr.rel (0) target = $region33
    $region32: #{tpu_custom_call.1} parent=1 // pred_region
      %125 = dma.done [#allocation4], 128
    $region33: #{tpu_custom_call.1} parent=1 // pred_fallthru
      _
    %126 = vsyncpa [#allocation3], 1
    %127 = vsyncpa [#allocation6], 1
    %128 = vsyncpa [#allocation4], 1

</llo_original>
